<compile_context>
chip_gen: v6e
topology: v6e:2x2x1
jax: 0.10.0
libtpu: 0.0.40
codegen_flags: <defaults>
</compile_context>

<pallas_src>
import jax
import jax.numpy as jnp
from jax import lax
from jax.experimental import pallas as pl
from jax.experimental.pallas import tpu as pltpu


def _round_up(x, n):
    return ((x + n - 1) // n) * n


def _vmem_budget_bytes():
    """Per-generation scoped-VMEM budget: 3/4 of physical VMEM (v5e/v6e 128 MiB -> 96,
    v7x 64 MiB -> 48).  Falls back to a conservative 48 MiB if the query fails."""
    cap = None
    try:
        cap = getattr(pltpu.get_tpu_info(), "vmem_capacity_bytes", None)
    except Exception:
        cap = None
    if not cap:
        cap = 64 * 1024 * 1024
    return (int(cap) * 3) // 4


# -----------------------------------------------------------------------------
# Pallas kernel 1: label propagation  Y <- (1-alpha) * A @ Y + alpha * Y   (T steps)
# -----------------------------------------------------------------------------
def _propagate(A, Y, alpha, T, *, row_tile=256):
    m, k = Y.shape
    T = int(T)
    alpha = float(alpha)
    if T <= 0:
        return Y.astype(jnp.float32)

    budget = _vmem_budget_bytes()

    tm = min(row_tile, _round_up(m, 16))      # sublane-aligned for the bf16 scratch
    m_pad = _round_up(m, tm)
    k_pad = _round_up(k, 128)                 # lane-dense Y columns (full-width vst)
    n_tiles = m_pad // tm

    A_p = jnp.zeros((m_pad, m_pad), jnp.bfloat16).at[:m, :m].set(A.astype(jnp.bfloat16))
    Y_p = jnp.zeros((m_pad, k_pad), jnp.float32).at[:m, :k].set(Y.astype(jnp.float32))

    # VMEM bookkeeping (assume 2 pipeline buffers per input/output block).
    ybuf_bytes = 2 * m_pad * k_pad * 2                      # bf16 ping-pong carried Y
    io_bytes = 4 * tm * k_pad * 4                           # Y0 + out tiles (f32)
    a_resident_bytes = 2 * m_pad * m_pad * 2                # resident A (worst case 2 bufs)
    a_resident = (a_resident_bytes + ybuf_bytes + io_bytes) <= (budget - (4 << 20))
    # TODO(synk): on v7x a fp8(e4m3) A would halve the streamed-A traffic; needs label
    #             stability validation, so A stays bf16 here.

    if a_resident:
        a_spec = pl.BlockSpec((m_pad, m_pad), lambda t, i: (0, 0))          # one DMA total
    else:
        # During the t==0 init pass no A is needed; pin the index to block 0 so the
        # init pass does not stream a full extra copy of A.
        a_spec = pl.BlockSpec((tm, m_pad), lambda t, i: (jnp.where(t == 0, 0, i), 0))

    def kernel(y0_ref, a_ref, out_ref, ybuf):
        t = pl.program_id(0)          # 0 = init pass, 1..T = propagation steps
        i = pl.program_id(1)
        row = pl.multiple_of(i * tm, tm)

        @pl.when(t == 0)
        def _init():
            # Seed the carried Y (slot 0) one row tile at a time from streamed Y0.
            # TODO(synk): bf16 carry introduces small drift vs the f32 torch reference;
            #             argmax labels are robust for row-stochastic A / soft labels.
            ybuf[0, pl.ds(row, tm), :] = y0_ref[...].astype(jnp.bfloat16)

        @pl.when(t > 0)
        def _step():
            src = lax.rem(t - 1, 2)
            dst = 1 - src
            if a_resident:
                a_tile = a_ref[pl.ds(row, tm), :]            # (tm, m_pad) bf16
            else:
                a_tile = a_ref[...]                          # (tm, m_pad) bf16
            y_old = ybuf[src]                                # (m_pad, k_pad) bf16
            rows_old = ybuf[src, pl.ds(row, tm), :]          # (tm, k_pad)   bf16
            new_rows = (1.0 - alpha) * jnp.dot(
                a_tile, y_old, preferred_element_type=jnp.float32
            ) + alpha * rows_old.astype(jnp.float32)
            ybuf[dst, pl.ds(row, tm), :] = new_rows.astype(jnp.bfloat16)

            @pl.when(t == T)
            def _emit():
                out_ref[...] = new_rows

    # TODO(synk): both grid axes stay "arbitrary" — the carried ping-pong Y scratch is
    #             per-core, so a v7x megacore row split would need CMEM/semaphore sync.
    out = pl.pallas_call(
        kernel,
        out_shape=jax.ShapeDtypeStruct((m_pad, k_pad), jnp.float32),
        grid=(T + 1, n_tiles),
        in_specs=[
            # Y0 is only needed during the init pass; afterwards pin to block 0 (no DMA).
            pl.BlockSpec((tm, k_pad), lambda t, i: (jnp.where(t == 0, i, 0), 0)),
            a_spec,
        ],
        # Output blocks only change index (and hence flush to HBM) on the final pass.
        out_specs=pl.BlockSpec((tm, k_pad), lambda t, i: (jnp.where(t == T, i, 0), 0)),
        scratch_shapes=[pltpu.VMEM((2, m_pad, k_pad), jnp.bfloat16)],   # ping-pong carried Y
        compiler_params=pltpu.CompilerParams(
            dimension_semantics=("arbitrary", "arbitrary"),
            vmem_limit_bytes=budget,
        ),
    )(Y_p, A_p)
    return out[:m, :k]


# -----------------------------------------------------------------------------
# Pallas kernel 2: per-class grams over class-grouped columns (MoE group-offset pattern)
#   G_j = W[:, cols of class j] @ W[:, cols of class j].T
# -----------------------------------------------------------------------------
def _class_grams(X, L_all, num_classes, *, m_chunk=2048):
    """Returns (grams[k, p_pad, p_pad] f32, counts[k] f32).  W's columns are grouped
    by class (argsort gather in XLA); a 1-D work-list grid streams each column chunk
    from HBM exactly once and accumulates only into its owning class's gram."""
    m, p = X.shape
    k = int(num_classes)

    p_pad = _round_up(p, 128)                     # lane-dense gram output / MXU-friendly
    tmc = min(int(m_chunk), _round_up(m, 128))
    m_pad = _round_up(m, tmc)
    n_blocks = m_pad // tmc
    n_work = n_blocks + k                         # static bound: class spans overlap only at boundaries

    # --- group columns of W by class (cheap XLA glue) --------------------------------
    order = jnp.argsort(L_all)
    W_sorted = jnp.take(X, order, axis=0).T                       # (p, m) class-grouped cols
    W_p = jnp.zeros((p_pad, m_pad), jnp.bfloat16).at[:p, :m].set(W_sorted.astype(jnp.bfloat16))

    counts = jnp.bincount(L_all, length=k).astype(jnp.int32)      # (k,)  tr(Pi_j)
    starts = jnp.concatenate(
        [jnp.zeros((1,), jnp.int32), jnp.cumsum(counts)[:-1].astype(jnp.int32)])
    ends = starts + counts

    first_blk = jnp.clip(starts // tmc, 0, n_blocks - 1)
    last_blk = jnp.clip(jnp.where(counts > 0, (ends - 1) // tmc, first_blk), 0, n_blocks - 1)
    last_blk = jnp.maximum(last_blk, first_blk)
    nb = last_blk - first_blk + 1                                 # >= 1 even for empty classes

    cum = jnp.concatenate([jnp.zeros((1,), jnp.int32), jnp.cumsum(nb).astype(jnp.int32)])
    total = cum[k]
    w_idx = jnp.arange(n_work, dtype=jnp.int32)
    valid = w_idx < total

    cls_raw = jnp.clip(jnp.searchsorted(cum[1:], w_idx, side="right"), 0, k - 1).astype(jnp.int32)
    wcls = jnp.where(valid, cls_raw, k - 1).astype(jnp.int32)
    blk_raw = first_blk[cls_raw] + (w_idx - cum[cls_raw])
    wblk = jnp.clip(jnp.where(valid, blk_raw, last_blk[k - 1]), 0, n_blocks - 1).astype(jnp.int32)
    wfirst = jnp.where(valid, (w_idx == cum[cls_raw]).astype(jnp.int32), 0).astype(jnp.int32)
    wlast = jnp.where(valid, (w_idx == cum[cls_raw] + nb[cls_raw] - 1).astype(jnp.int32),
                      0).astype(jnp.int32)
    wlo = jnp.clip(starts[wcls] - wblk * tmc, 0, tmc).astype(jnp.int32)
    whi = jnp.where(valid, jnp.clip(ends[wcls] - wblk * tmc, 0, tmc), 0).astype(jnp.int32)

    def kernel(cls_ref, blk_ref, first_ref, last_ref, lo_ref, hi_ref,
               w_ref, out_ref, acc_ref):
        del cls_ref, blk_ref                       # only used by the index maps
        w = pl.program_id(0)
        lo = lo_ref[w]
        hi = hi_ref[w]
        nonempty = hi > lo
        full = jnp.logical_and(lo == 0, hi == tmc)

        @pl.when(first_ref[w] == 1)
        def _():
            acc_ref[...] = jnp.zeros_like(acc_ref)

        # Interior chunk: all columns belong to this class -> no mask work at all.
        @pl.when(jnp.logical_and(nonempty, full))
        def _():
            wt = w_ref[...]                                       # (p_pad, tmc) bf16
            acc_ref[...] += lax.dot_general(
                wt, wt, (((1,), (1,)), ((), ())),
                preferred_element_type=jnp.float32)

        # Boundary chunk (shared with a neighbouring class): mask the column range.
        @pl.when(jnp.logical_and(nonempty, jnp.logical_not(full)))
        def _():
            wt = w_ref[...]
            cols = lax.broadcasted_iota(jnp.int32, (1, tmc), 1)
            keep = jnp.logical_and(cols >= lo, cols < hi)
            wm = jnp.where(keep, wt, jnp.zeros_like(wt))          # bit-select (v5e-safe)
            acc_ref[...] += lax.dot_general(
                wm, wt, (((1,), (1,)), ((), ())),
                preferred_element_type=jnp.float32)

        @pl.when(last_ref[w] == 1)
        def _():
            out_ref[0] = acc_ref[...]

    # TODO(synk): 1-D work list runs on one TensorCore; a v7x 2-way class split would
    #             need an explicit core axis + per-core work lists.
    grams = pl.pallas_call(
        kernel,
        out_shape=jax.ShapeDtypeStruct((k, p_pad, p_pad), jnp.float32),
        grid_spec=pltpu.PrefetchScalarGridSpec(
            num_scalar_prefetch=6,
            grid=(n_work,),
            in_specs=[
                pl.BlockSpec((p_pad, tmc),
                             lambda w, cls, blk, first, last, lo, hi: (0, blk[w])),
            ],
            out_specs=pl.BlockSpec((1, p_pad, p_pad),
                                   lambda w, cls, blk, first, last, lo, hi: (cls[w], 0, 0)),
            scratch_shapes=[pltpu.VMEM((p_pad, p_pad), jnp.float32)],
        ),
        compiler_params=pltpu.CompilerParams(
            dimension_semantics=("arbitrary",),
            vmem_limit_bytes=_vmem_budget_bytes(),
        ),
    )(wcls, wblk, wfirst, wlast, wlo, whi, W_p)
    return grams, counts.astype(jnp.float32)


# -----------------------------------------------------------------------------
# Glue: Cholesky-based logdet for SPD matrices.
# -----------------------------------------------------------------------------
def _chol_logdet(mat):
    # TODO(synk): torch.logdet has no Pallas TPU primitive; matrices here are I + PSD
    # (SPD), so logdet = 2 * sum(log(diag(chol))).
    L = jnp.linalg.cholesky(mat)
    return 2.0 * jnp.sum(jnp.log(jnp.diagonal(L, axis1=-2, axis2=-1)), axis=-1)


# -----------------------------------------------------------------------------
# Module
# -----------------------------------------------------------------------------
class MaximalCodingRateReduction:
    def __init__(self, gam1=1.0, gam2=1.0, eps=0.01, corafull=False):
        self.gam1 = float(gam1)
        self.gam2 = float(gam2)
        self.eps = float(eps)
        self.corafull = corafull

    def forward(self, X, y, A, Y, alpha, beta, T, train_mask, num_classes=None):
        if num_classes is None:
            # Fallback only for concrete `y`; pass num_classes explicitly to stay
            # jit-friendly (avoids a device->host sync).
            num_classes = int(jnp.max(y)) + 1
        k = int(num_classes)

        X = X.astype(jnp.float32)
        m, p = X.shape

        # TODO(synk): compute_sematic_labels() is an external, undefined function in
        # the reference source. Deterministic stand-in: train nodes take one-hot
        # ground-truth labels, other nodes keep the supplied soft labels Y.
        Y_onehot = jax.nn.one_hot(y, k, dtype=jnp.float32)
        Y_all = jnp.where(train_mask[:, None], Y_onehot, Y.astype(jnp.float32))

        # Structural propagation (Pallas kernel).
        Y_all = _propagate(A, Y_all, alpha, T)
        L_all = jnp.argmax(Y_all, axis=1)

        # Per-class grams over class-grouped columns (Pallas); the discriminative gram
        # is the sum over classes since the argmax labels partition the columns of W
        # (this would break for soft/overlapping memberships).
        grams, counts = _class_grams(X, L_all, k)                 # (k, p_pad, p_pad), (k,)
        G = jnp.sum(grams, axis=0)                                # == W @ W.T (zero-padded)

        p_pad = grams.shape[-1]
        eye_p = jnp.eye(p_pad, dtype=jnp.float32)                 # padded eye: logdet unchanged
        scalar = p / (m * self.eps)
        d_emp = _chol_logdet(eye_p + (self.gam1 * scalar) * G) / 2.0

        trPi = counts + 1e-8                                      # tr(Pi_j)
        scal_c = p / (trPi * self.eps)
        Ms = eye_p[None, :, :] + scal_c[:, None, None] * grams    # (k, p_pad, p_pad)
        logdets = _chol_logdet(Ms)                                # (k,)
        c_emp = jnp.sum(logdets * trPi / m) / 2.0

        total_loss_empi = -self.gam2 * d_emp + self.gam1 * c_emp

        if self.corafull:
            # forward_ERASEmanyclass: only empirical terms are computed.
            return total_loss_empi, [d_emp, c_emp], L_all

        d_theo = _chol_logdet(eye_p + scalar * G) / 2.0
        c_theo = jnp.sum(trPi / (2.0 * m) * logdets)
        # Returned losses are device scalars (no .item()-style host sync).
        return total_loss_empi, [d_emp, c_emp], [d_theo, c_theo], L_all

    __call__ = forward


# -----------------------------------------------------------------------------
# Demo
# -----------------------------------------------------------------------------
if __name__ == "__main__":
    key = jax.random.PRNGKey(0)
    m, p, k = 64, 16, 4                     # nodes, feature dim, classes
    k1, k2, k3, k4, k5 = jax.random.split(key, 5)

    X = jax.random.normal(k1, (m, p), dtype=jnp.float32)
    X = X / (jnp.linalg.norm(X, axis=1, keepdims=True) + 1e-8)   # row-normalized features
    y = jax.random.randint(k2, (m,), 0, k)                       # ground-truth labels
    A_raw = jax.random.uniform(k3, (m, m), dtype=jnp.float32)
    A_sym = (A_raw + A_raw.T) / 2.0
    A = A_sym / jnp.sum(A_sym, axis=1, keepdims=True)            # row-stochastic adjacency
    Y = jax.random.uniform(k4, (m, k), dtype=jnp.float32)
    Y = Y / jnp.sum(Y, axis=1, keepdims=True)                    # soft semantic labels
    train_mask = jax.random.bernoulli(k5, 0.5, (m,))

    alpha, beta, T = 0.1, 0.5, 3

    loss_fn = MaximalCodingRateReduction(gam1=1.0, gam2=1.0, eps=0.01, corafull=False)
    total, emp, theo, L_all = loss_fn(X, y, A, Y, alpha, beta, T, train_mask,
                                      num_classes=k)

    jax.block_until_ready(total)
    jax.block_until_ready(L_all)
    print("KERNEL_OK")
</pallas_src>

<mosaic_0001>
module attributes {stable_mosaic.version = 11 : i64} {
  func.func @kernel(%arg0: i32, %arg1: i32, %arg2: memref<64x128xf32, #tpu.memory_space<vmem>>, %arg3: memref<64x64xbf16, #tpu.memory_space<vmem>>, %arg4: memref<64x128xf32, #tpu.memory_space<vmem>>, %arg5: memref<2x64x128xbf16, #tpu.memory_space<vmem>>) attributes {dimension_semantics = [#tpu.dimension_semantics<arbitrary>, #tpu.dimension_semantics<arbitrary>], iteration_bounds = array<i64: 4, 1>, scalar_prefetch = 0 : i64, scratch_operands = 1 : i64, tpu.core_type = #tpu.core_type<tc>, window_params = [{transform_indices = @transform_0, window_bounds = array<i64: 64, 128>}, {pipeline_mode = #tpu.pipeline_mode<synchronous>, transform_indices = @transform_1, window_bounds = array<i64: 64, 64>}, {transform_indices = @transform_2, window_bounds = array<i64: 64, 128>}]} {
    %c64_i32 = arith.constant 64 : i32
    %0 = arith.muli %arg1, %c64_i32 : i32
    %1 = tpu.assume_multiple %0, 64 : i32
    %c0_i32 = arith.constant 0 : i32
    %2 = arith.cmpi eq, %arg0, %c0_i32 : i32
    %3 = arith.extui %2 : i1 to i32
    %c0_i32_0 = arith.constant 0 : i32
    %4 = arith.cmpi ne, %3, %c0_i32_0 : i32
    scf.if %4 {
      %c0 = arith.constant 0 : index
      %c0_3 = arith.constant 0 : index
      %8 = vector.load %arg2[%c0, %c0_3] : memref<64x128xf32, #tpu.memory_space<vmem>>, vector<64x128xf32>
      %9 = arith.truncf %8 : vector<64x128xf32> to vector<64x128xbf16>
      %c0_4 = arith.constant 0 : index
      %10 = arith.index_cast %1 : i32 to index
      %c0_5 = arith.constant 0 : index
      %11 = vector.load %arg5[%c0_4, %10, %c0_5] : memref<2x64x128xbf16, #tpu.memory_space<vmem>>, vector<1x64x128xbf16>
      %12 = vector.shape_cast %11 : vector<1x64x128xbf16> to vector<64x128xbf16>
      %13 = vector.shape_cast %9 : vector<64x128xbf16> to vector<1x64x128xbf16>
      tpu.vector_store %arg5[%c0_4, %10, %c0_5], %13 {strides = array<i32>} : memref<2x64x128xbf16, #tpu.memory_space<vmem>>, vector<1x64x128xbf16>,
    } else {
    }
    %c0_i32_1 = arith.constant 0 : i32
    %5 = arith.cmpi sgt, %arg0, %c0_i32_1 : i32
    %6 = arith.extui %5 : i1 to i32
    %c0_i32_2 = arith.constant 0 : i32
    %7 = arith.cmpi ne, %6, %c0_i32_2 : i32
    scf.if %7 {
      %c1_i32 = arith.constant 1 : i32
      %8 = arith.subi %arg0, %c1_i32 : i32
      %c2_i32 = arith.constant 2 : i32
      %9 = arith.remsi %8, %c2_i32 : i32
      %c1_i32_3 = arith.constant 1 : i32
      %10 = arith.subi %c1_i32_3, %9 : i32
      %11 = arith.index_cast %1 : i32 to index
      %c0 = arith.constant 0 : index
      %12 = vector.load %arg3[%11, %c0] : memref<64x64xbf16, #tpu.memory_space<vmem>>, vector<64x64xbf16>
      %13 = arith.index_cast %9 : i32 to index
      %c0_4 = arith.constant 0 : index
      %c0_5 = arith.constant 0 : index
      %14 = vector.load %arg5[%13, %c0_4, %c0_5] : memref<2x64x128xbf16, #tpu.memory_space<vmem>>, vector<1x64x128xbf16>
      %15 = vector.shape_cast %14 : vector<1x64x128xbf16> to vector<64x128xbf16>
      %16 = arith.index_cast %9 : i32 to index
      %17 = arith.index_cast %1 : i32 to index
      %c0_6 = arith.constant 0 : index
      %18 = vector.load %arg5[%16, %17, %c0_6] : memref<2x64x128xbf16, #tpu.memory_space<vmem>>, vector<1x64x128xbf16>
      %19 = vector.shape_cast %18 : vector<1x64x128xbf16> to vector<64x128xbf16>
      %cst = arith.constant dense<0.000000e+00> : vector<64x128xf32>
      %20 = tpu.matmul %12, %15, %cst {dimension_numbers = #tpu.dot_dimension_numbers<[1], [0], [0], [1], [0, 0, 1, 1], [], []>} : vector<64x64xbf16>, vector<64x128xbf16>, vector<64x128xf32> -> vector<64x128xf32>
      %cst_7 = arith.constant 0.899999976 : f32
      %21 = vector.broadcast %cst_7 : f32 to vector<64x128xf32>
      %22 = arith.mulf %21, %20 : vector<64x128xf32>
      %23 = arith.extf %19 : vector<64x128xbf16> to vector<64x128xf32>
      %cst_8 = arith.constant 1.000000e-01 : f32
      %24 = vector.broadcast %cst_8 : f32 to vector<64x128xf32>
      %25 = arith.mulf %24, %23 : vector<64x128xf32>
      %26 = arith.addf %22, %25 : vector<64x128xf32>
      %27 = arith.truncf %26 : vector<64x128xf32> to vector<64x128xbf16>
      %28 = arith.index_cast %10 : i32 to index
      %29 = arith.index_cast %1 : i32 to index
      %c0_9 = arith.constant 0 : index
      %30 = vector.load %arg5[%28, %29, %c0_9] : memref<2x64x128xbf16, #tpu.memory_space<vmem>>, vector<1x64x128xbf16>
      %31 = vector.shape_cast %30 : vector<1x64x128xbf16> to vector<64x128xbf16>
      %32 = vector.shape_cast %27 : vector<64x128xbf16> to vector<1x64x128xbf16>
      tpu.vector_store %arg5[%28, %29, %c0_9], %32 {strides = array<i32>} : memref<2x64x128xbf16, #tpu.memory_space<vmem>>, vector<1x64x128xbf16>,
      %c3_i32 = arith.constant 3 : i32
      %33 = arith.cmpi eq, %arg0, %c3_i32 : i32
      %34 = arith.extui %33 : i1 to i32
      %c0_i32_10 = arith.constant 0 : i32
      %35 = arith.cmpi ne, %34, %c0_i32_10 : i32
      scf.if %35 {
        %c0_11 = arith.constant 0 : index
        %c0_12 = arith.constant 0 : index
        %36 = vector.load %arg4[%c0_11, %c0_12] : memref<64x128xf32, #tpu.memory_space<vmem>>, vector<64x128xf32>
        tpu.vector_store %arg4[%c0_11, %c0_12], %26 {strides = array<i32>} : memref<64x128xf32, #tpu.memory_space<vmem>>, vector<64x128xf32>,
      } else {
      }
    } else {
    }
    return
  }
  func.func @transform_0(%arg0: i32, %arg1: i32) -> (i32, i32) {
    %c0_i32 = arith.constant 0 : i32
    %0 = arith.cmpi eq, %arg0, %c0_i32 : i32
    %c0_i32_0 = arith.constant 0 : i32
    %1 = arith.select %0, %arg1, %c0_i32_0 : i32
    %c0_i32_1 = arith.constant 0 : i32
    %c0_i32_2 = arith.constant 0 : i32
    return %1, %c0_i32_1 : i32, i32
  }
  func.func @transform_1(%arg0: i32, %arg1: i32) -> (i32, i32) {
    %c0_i32 = arith.constant 0 : i32
    %c0_i32_0 = arith.constant 0 : i32
    %c0_i32_1 = arith.constant 0 : i32
    return %c0_i32, %c0_i32_0 : i32, i32
  }
  func.func @transform_2(%arg0: i32, %arg1: i32) -> (i32, i32) {
    %c3_i32 = arith.constant 3 : i32
    %0 = arith.cmpi eq, %arg0, %c3_i32 : i32
    %c0_i32 = arith.constant 0 : i32
    %1 = arith.select %0, %arg1, %c0_i32 : i32
    %c0_i32_0 = arith.constant 0 : i32
    %c0_i32_1 = arith.constant 0 : i32
    return %1, %c0_i32_0 : i32, i32
  }
}

</mosaic_0001>

<llo_original>
// kernel: tpu_custom_call.1
$region0: #{tpu_custom_call.1}
  #allocation0 [shape = 'u32[]', space=smem, size = 0x4, offset = 0x4, fixed_abs, tag = 'smem constant byte address 0x4 - core index']
  #allocation1 [shape = 'u32[144,128]{1,0:T(1,128)}', space=vmem, size = 0x12000, scoped, tag = 'internal scratch']
  #allocation2 [shape = 'bf16[2,64,128]{2,1,0:T(8,128)(2,1)}', space=vmem, size = 0x8000, scoped, tag = 'scratch operand']
  %s0 = inlined_call_operand.hbm [shape: f32[64,128], index: 0, kind: input, shape index: {}]
  %s1 = inlined_call_operand.hbm [shape: bf16[64,64], index: 1, kind: input, shape index: {}]
  %s2 = inlined_call_operand.hbm [shape: f32[64,128], index: 2, kind: output, shape index: {}]
  %s3 = sld [smem:[#allocation0]]
  $region61: #{tpu_custom_call.1} parent=0
    _
  %s5 = ssub.s32 1, %s3
  %s6 = scalar_select 0, %s5, %s3
  $region1: #{tpu_custom_call.1} parent=0
    #allocation3 [shape = 'u8[65536]{0}', space=vmem, size = 0x10000, scoped, tag = 'input window, operand 0']
    #allocation4 [shape = 's32[2]{0}', space=sflag, size = 0x8, scoped, tag = 'scoped memory for tpu_custom_call.1']
    #allocation5 [shape = 's32[2]{0}', space=sflag, size = 0x8, scoped, tag = 'scoped memory for tpu_custom_call.1']
    #allocation6 [shape = 'u8[16384]{0}', space=vmem, size = 0x4000, scoped, tag = 'input window, operand 1, single buffered']
    #allocation7 [shape = 's32[1]{0}', space=sflag, size = 0x4, scoped, tag = 'scoped memory for tpu_custom_call.1']
    #allocation8 [shape = 'u8[65536]{0}', space=vmem, size = 0x10000, scoped, tag = 'output window, operand 0']
    %7 = vsyncpa [#allocation4], 0
    %s8 = scalar_lea.sflag [#allocation4], 1
    %9 = vsyncpa %s8, 0
    %10 = vsyncpa [#allocation7], 0
    %11 = vsyncpa [#allocation5], 0
    %s12 = scalar_lea.sflag [#allocation5], 1
    %13 = vsyncpa %s12, 0
    loop: start=0, step=1, limit=6
    $region2: #{tpu_custom_call.1} parent=1 // loop_pre_header
      _
    $region3: #{tpu_custom_call.1} parent=1 // loop_header
      %s15 = sphi 0, %s19
      %p16 = scmp.ge.s32.totalorder %s15, 6
      %s22 = sphi 0, %s34
      %s23 = sphi 0, %s30
      %s24 = sphi 0, %s22
      %s25 = sphi 0, %s23
      %s26 = sphi 0, %s24
      %s27 = sphi 0, %s25
      %s41 = sphi 0, %s43
      %s44 = sphi 0, %s41
      %s45 = sphi 0, %s44
      %s61 = sphi 0, %s45
      %s65 = sphi 0, %s65
      %s67 = sphi 0, %s65
      %s68 = sphi 0, %s67
      %s82 = sphi 0, %s68
      %s92 = sphi 0, %s94
      %s95 = sphi 0, %s92
      %s96 = sphi 0, %s95
      %s112 = sphi 0, %s96
    $region4: #{tpu_custom_call.1} parent=1 // loop_header_branch
      %18 = sbr.rel (%p16) target = $region8
    $region5: #{tpu_custom_call.1} parent=1 // loop_body
      %s20 = ssub.s32 %s15, 1
      %s21 = ssub.s32 %s15, 2
      %s28 = sadd.s32 1, %s23
      %p29 = scmp.ge.s32.totalorder %s28, 1
      %s30 = scalar_select %p29, 0, %s28
      %s31 = sadd.s32 1, %s22
      %s32 = scalar_select %p29, %s31, %s22
      %p33 = scmp.ge.s32.totalorder %s32, 4
      %s34 = scalar_select %p33, 0, %s32
      %p35 = scmp.eq.s32.totalorder %s22, 0
      %s36 = scalar_select %p35, %s23, 0
      %p37 = scmp.eq.s32.totalorder %s34, 0
      %s38 = scalar_select %p37, %s30, 0
      %s39 = ssub.s32 %s36, %s38
      %p40 = scmp.eq.s32.totalorder %s39, 0
      %s42 = sadd.s32 %s41, 1
      %s43 = scalar_select %p40, %s41, %s42
      %p46 = pneg %p40
      %p47 = scmp.eq.s32.totalorder %s15, 3
      %p48 = por %p46, %p47
      %p49 = scmp.ne.s32.totalorder %s41, %s44
      %p50 = scmp.eq.s32.totalorder %s15, 0
      %p51 = por %p49, %p50
      %p52 = scmp.ne.s32.totalorder %s41, %s44
      %p53 = scmp.eq.s32.totalorder %s20, 3
      %p54 = por %p52, %p53
      %p55 = scmp.ne.s32.totalorder %s44, %s45
      %p56 = scmp.eq.s32.totalorder %s20, 0
      %p57 = por %p55, %p56
      %p58 = scmp.ne.s32.totalorder %s44, %s45
      %p59 = scmp.eq.s32.totalorder %s21, 3
      %p60 = por %p58, %p59
      %p62 = scmp.ne.s32.totalorder %s45, %s61
      %p63 = scmp.eq.s32.totalorder %s21, 0
      %p64 = por %p62, %p63
      %s66 = sadd.s32 %s65, 1
      %p69 = scmp.eq.s32.totalorder %s15, 3
      %p70 = scmp.ne.s32.totalorder %s65, %s67
      %p71 = scmp.eq.s32.totalorder %s15, 0
      %p72 = por %p70, %p71
      %p73 = scmp.ne.s32.totalorder %s65, %s67
      %p74 = scmp.eq.s32.totalorder %s20, 3
      %p75 = por %p73, %p74
      %p76 = scmp.ne.s32.totalorder %s67, %s68
      %p77 = scmp.eq.s32.totalorder %s20, 0
      %p78 = por %p76, %p77
      %p79 = scmp.ne.s32.totalorder %s67, %s68
      %p80 = scmp.eq.s32.totalorder %s21, 3
      %p81 = por %p79, %p80
      %p83 = scmp.ne.s32.totalorder %s68, %s82
      %p84 = scmp.eq.s32.totalorder %s21, 0
      %p85 = por %p83, %p84
      %p86 = scmp.eq.s32.totalorder %s22, 3
      %s87 = scalar_select %p86, %s23, 0
      %p88 = scmp.eq.s32.totalorder %s34, 3
      %s89 = scalar_select %p88, %s30, 0
      %s90 = ssub.s32 %s87, %s89
      %p91 = scmp.eq.s32.totalorder %s90, 0
      %s93 = sadd.s32 %s92, 1
      %s94 = scalar_select %p91, %s92, %s93
      %p97 = pneg %p91
      %p98 = scmp.eq.s32.totalorder %s15, 3
      %p99 = por %p97, %p98
      %p100 = scmp.ne.s32.totalorder %s92, %s95
      %p101 = scmp.eq.s32.totalorder %s15, 0
      %p102 = por %p100, %p101
      %p103 = scmp.ne.s32.totalorder %s92, %s95
      %p104 = scmp.eq.s32.totalorder %s20, 3
      %p105 = por %p103, %p104
      %p106 = scmp.ne.s32.totalorder %s95, %s96
      %p107 = scmp.eq.s32.totalorder %s20, 0
      %p108 = por %p106, %p107
      %p109 = scmp.ne.s32.totalorder %s95, %s96
      %p110 = scmp.eq.s32.totalorder %s21, 3
      %p111 = por %p109, %p110
      %p113 = scmp.ne.s32.totalorder %s96, %s112
      %p114 = scmp.eq.s32.totalorder %s21, 0
      %p115 = por %p113, %p114
      %p116 = scmp.le.s32.totalorder 1, %s15
      %p117 = scmp.lt.s32.totalorder %s15, 5
      %p118 = pnand %p116, %p117
      %p119 = pneg %p118
      // Predicated region
      $region9: #{tpu_custom_call.1} parent=5 // pred_check
        _
      $region10: #{tpu_custom_call.1} parent=5 // pred_check_branch
        %121 = sbr.rel (%p118) target = $region12
      $region11: #{tpu_custom_call.1} parent=5 // pred_region
        %s122 = ssub.s32 %s15, 1
        // Predicated region
        $region13: #{tpu_custom_call.1} parent=11 // pred_check
          %p123 = pneg %p78
        $region14: #{tpu_custom_call.1} parent=11 // pred_check_branch
          %125 = sbr.rel (%p123) target = $region16
        $region15: #{tpu_custom_call.1} parent=11 // pred_region
          %s127 = ssub.s32 512, 512
          %128 = vsyncadd [#allocation7], %s127
          %s129 = sshll.u32 [#allocation6], 4
          %s130 = int_to_ptr.vmem [resolvable:$true] %s129
          %135 = dma.hbm_to_vmem [thread:$0]  %s1, 512, %s130, [#allocation7], 64, 64, 4
        $region16: #{tpu_custom_call.1} parent=11 // pred_fallthru
          _
      $region12: #{tpu_custom_call.1} parent=5 // pred_fallthru
        _
      %p136 = scmp.lt.s32.totalorder %s15, 4
      // Predicated region
      $region17: #{tpu_custom_call.1} parent=5 // pred_check
        %p137 = pneg %p136
      $region18: #{tpu_custom_call.1} parent=5 // pred_check_branch
        %139 = sbr.rel (%p137) target = $region20
      $region19: #{tpu_custom_call.1} parent=5 // pred_region
        // Predicated region
        $region21: #{tpu_custom_call.1} parent=19 // pred_check
          %p140 = pneg %p51
        $region22: #{tpu_custom_call.1} parent=19 // pred_check_branch
          %142 = sbr.rel (%p140) target = $region24
        $region23: #{tpu_custom_call.1} parent=19 // pred_region
          %s143 = sand.u32 %s41, 1
          %s144 = scalar_lea.sflag [#allocation4], %s143
          %s145 = sand.u32 %s41, 1
          %s146 = smul.addr %s145, 64
          %s147 = scalar_lea.vmem [#allocation3], %s146
          %p148 = scmp.eq.s32.totalorder %s22, 0
          %s149 = scalar_select %p148, %s23, 0
          %s150 = smul.u32 8, %s149
          %s152 = ssub.s32 1024, 1024
          %153 = vsyncadd %s144, %s152
          %s154 = smul.addr %s150, 128
          %s155 = scalar_lea.hbm %s0, %s154
          %s156 = sshll.u32 %s147, 4
          %s157 = int_to_ptr.vmem [resolvable:$true] %s156
          %162 = dma.hbm_to_vmem [thread:$0]  %s155, 1024, %s157, %s144, 128, 128, 8
        $region24: #{tpu_custom_call.1} parent=19 // pred_fallthru
          _
      $region20: #{tpu_custom_call.1} parent=5 // pred_fallthru
        _
      %p163 = scmp.le.s32.totalorder 1, %s15
      %p164 = scmp.lt.s32.totalorder %s15, 5
      %p165 = pnand %p163, %p164
      %p166 = pneg %p165
      // Predicated region
      $region25: #{tpu_custom_call.1} parent=5 // pred_check
        _
      $region26: #{tpu_custom_call.1} parent=5 // pred_check_branch
        %168 = sbr.rel (%p165) target = $region28
      $region27: #{tpu_custom_call.1} parent=5 // pred_region
        %s169 = ssub.s32 %s15, 1
        %s170 = sand.u32 %s44, 1
        %s171 = scalar_lea.sflag [#allocation4], %s170
        %s172 = sand.u32 %s44, 1
        %s173 = smul.addr %s172, 64
        %s174 = scalar_lea.vmem [#allocation3], %s173
        // Predicated region
        $region29: #{tpu_custom_call.1} parent=27 // pred_check
          %p175 = pneg %p57
        $region30: #{tpu_custom_call.1} parent=27 // pred_check_branch
          %177 = sbr.rel (%p175) target = $region32
        $region31: #{tpu_custom_call.1} parent=27 // pred_region
          %178 = dma.done %s171, 1024
        $region32: #{tpu_custom_call.1} parent=27 // pred_fallthru
          _
        // Predicated region
        $region33: #{tpu_custom_call.1} parent=27 // pred_check
          %p179 = pneg %p78
        $region34: #{tpu_custom_call.1} parent=27 // pred_check_branch
          %181 = sbr.rel (%p179) target = $region36
        $region35: #{tpu_custom_call.1} parent=27 // pred_region
          %182 = dma.done [#allocation7], 512
        $region36: #{tpu_custom_call.1} parent=27 // pred_fallthru
          _
        %s183 = sand.u32 %s44, 1
        %s184 = scalar_lea.sflag [#allocation4], %s183
        %s185 = sand.u32 %s44, 1
        %s186 = smul.addr %s185, 64
        %s187 = scalar_lea.vmem [#allocation3], %s186
        %p188 = pneg %p57
        %p189 = pneg %p54
        %p190 = pneg %p78
        %p191 = pneg %p75
        %p192 = pneg %p108
        %p193 = pneg %p105
        %s194 = sand.u32 %s95, 1
        %s195 = scalar_lea.sflag [#allocation5], %s194
        %s196 = sand.u32 %s95, 1
        %s197 = smul.addr %s196, 64
        %s198 = scalar_lea.vmem [#allocation8], %s197
        %p199 = scmp.eq.s32.totalorder %s24, 0
        %s200 = scalar_select %p199, %s25, 0
        %s201 = smul.u32 8, %s200
        %p202 = scmp.eq.s32.totalorder %s24, 3
        %s203 = scalar_select %p202, %s25, 0
        %s204 = smul.u32 8, %s203
        %s206 = smul.u32 %s25, 64
        %p207 = scmp.eq.s32.totalorder %s24, 0
        // Predicated region
        $region37: #{tpu_custom_call.1} parent=27 // pred_check
          %p208 = pneg %p207
        $region38: #{tpu_custom_call.1} parent=27 // pred_check_branch
          %210 = sbr.rel (%p208) target = $region40
        $region39: #{tpu_custom_call.1} parent=27 // pred_region
          %v211 = vld [vmem:[%s174] sm:$0xff]
          %v212 = vld [vmem:[%s174 + $0x8] sm:$0xff]
          %v213 = vld [vmem:[%s174 + $0x10] sm:$0xff]
          %v214 = vld [vmem:[%s174 + $0x18] sm:$0xff]
          %v215 = vld [vmem:[%s174 + $0x20] sm:$0xff]
          %v216 = vld [vmem:[%s174 + $0x28] sm:$0xff]
          %v217 = vld [vmem:[%s174 + $0x30] sm:$0xff]
          %v218 = vld [vmem:[%s174 + $0x38] sm:$0xff]
          %v219 = vpack.c.bf16 %v212, %v211
          %v220 = vpack.c.bf16 %v214, %v213
          %v221 = vpack.c.bf16 %v216, %v215
          %v222 = vpack.c.bf16 %v218, %v217
          %v227 = vunpack.c.l.b16 %v219
          %v228 = vunpack.c.h.b16 %v219
          %v229 = vunpack.c.l.b16 %v220
          %v230 = vunpack.c.h.b16 %v220
          %v231 = vunpack.c.l.b16 %v221
          %v232 = vunpack.c.h.b16 %v221
          %v233 = vunpack.c.l.b16 %v222
          %v234 = vunpack.c.h.b16 %v222
          %v235 = vpack.c.b16 %v227, %v227
          %v236 = vpack.c.b16 %v228, %v228
          %v237 = vpack.c.b16 %v229, %v229
          %v238 = vpack.c.b16 %v230, %v230
          %v239 = vpack.c.b16 %v231, %v231
          %v240 = vpack.c.b16 %v232, %v232
          %v241 = vpack.c.b16 %v233, %v233
          %v242 = vpack.c.b16 %v234, %v234
          %s251 = sshra.s32 %s206, 3
          %s252 = sand.u32 %s206, 7
          %s253 = smul.addr %s251, 4
          %s254 = scalar_lea.vmem [#allocation2], %s253
          %255 = vst [vmem:[%s254] sm:$0xf] %v235
          %256 = vst [vmem:[%s254 + $0x4] sm:$0xf] %v236
          %257 = vst [vmem:[%s254 + $0x8] sm:$0xf] %v237
          %258 = vst [vmem:[%s254 + $0xc] sm:$0xf] %v238
          %259 = vst [vmem:[%s254 + $0x10] sm:$0xf] %v239
          %260 = vst [vmem:[%s254 + $0x14] sm:$0xf] %v240
          %261 = vst [vmem:[%s254 + $0x18] sm:$0xf] %v241
          %262 = vst [vmem:[%s254 + $0x1c] sm:$0xf] %v242
        $region40: #{tpu_custom_call.1} parent=27 // pred_fallthru
          _
        %p263 = scmp.gt.s32.totalorder %s24, 0
        // Predicated region
        $region41: #{tpu_custom_call.1} parent=27 // pred_check
          %p264 = pneg %p263
        $region42: #{tpu_custom_call.1} parent=27 // pred_check_branch
          %266 = sbr.rel (%p264) target = $region44
        $region43: #{tpu_custom_call.1} parent=27 // pred_region
          %s267 = ssub.s32 %s24, 1
          %p268 = scmp.lt.s32.totalorder %s267, 0
          %s269 = ssub.s32 0, %s267
          %s270 = scalar_select %p268, %s269, %s267
          %s271 = sand.u32 %s270, 1
          %s272 = ssub.s32 0, %s271
          %s273 = scalar_select %p268, %s272, %s271
          %s274 = ssub.s32 1, %s273
          %s275 = sshra.s32 %s206, 3
          %s276 = sand.u32 %s206, 7
          %s277 = smul.addr %s275, 4
          %s278 = scalar_lea.vmem [#allocation6], %s277
          %v279 = vld [vmem:[%s278] sm:$0xf]
          %v280 = vld [vmem:[%s278 + $0x4] sm:$0xf]
          %v281 = vld [vmem:[%s278 + $0x8] sm:$0xf]
          %v282 = vld [vmem:[%s278 + $0xc] sm:$0xf]
          %v283 = vld [vmem:[%s278 + $0x10] sm:$0xf]
          %v284 = vld [vmem:[%s278 + $0x14] sm:$0xf]
          %v285 = vld [vmem:[%s278 + $0x18] sm:$0xf]
          %v286 = vld [vmem:[%s278 + $0x1c] sm:$0xf]
          %s287 = smul.u32 %s273, 8
          %s288 = smul.addr %s287, 4
          %s289 = scalar_lea.vmem [#allocation2], %s288
          %v290 = vld [vmem:[%s289] sm:$0xf]
          %v291 = vld [vmem:[%s289 + $0x4] sm:$0xf]
          %v292 = vld [vmem:[%s289 + $0x8] sm:$0xf]
          %v293 = vld [vmem:[%s289 + $0xc] sm:$0xf]
          %v294 = vld [vmem:[%s289 + $0x10] sm:$0xf]
          %v295 = vld [vmem:[%s289 + $0x14] sm:$0xf]
          %v296 = vld [vmem:[%s289 + $0x18] sm:$0xf]
          %v297 = vld [vmem:[%s289 + $0x1c] sm:$0xf]
          %s298 = sadd.s32 %s275, %s287
          %s299 = smul.addr %s298, 4
          %s300 = scalar_lea.vmem [#allocation2], %s299
          %v301 = vld [vmem:[%s300] sm:$0xf]
          %v302 = vld [vmem:[%s300 + $0x4] sm:$0xf]
          %v303 = vld [vmem:[%s300 + $0x8] sm:$0xf]
          %v304 = vld [vmem:[%s300 + $0xc] sm:$0xf]
          %v305 = vld [vmem:[%s300 + $0x10] sm:$0xf]
          %v306 = vld [vmem:[%s300 + $0x14] sm:$0xf]
          %v307 = vld [vmem:[%s300 + $0x18] sm:$0xf]
          %v308 = vld [vmem:[%s300 + $0x1c] sm:$0xf]
          %v317 = vunpack.c.l.b16 %v279
          %v318 = vunpack.c.l.b16 %v280
          %v319 = vunpack.c.l.b16 %v281
          %v320 = vunpack.c.l.b16 %v282
          %v321 = vunpack.c.l.b16 %v283
          %v322 = vunpack.c.l.b16 %v284
          %v323 = vunpack.c.l.b16 %v285
          %v324 = vunpack.c.l.b16 %v286
          %v325 = vpack.c.b16 %v318, %v317
          %v326 = vpack.c.b16 %v320, %v319
          %v327 = vpack.c.b16 %v322, %v321
          %v328 = vpack.c.b16 %v324, %v323
          %v337 = vunpack.c.l.b16 %v290
          %v338 = vunpack.c.l.b16 %v291
          %v339 = vunpack.c.l.b16 %v292
          %v340 = vunpack.c.l.b16 %v293
          %v341 = vunpack.c.l.b16 %v294
          %v342 = vunpack.c.l.b16 %v295
          %v343 = vunpack.c.l.b16 %v296
          %v344 = vunpack.c.l.b16 %v297
          %v345 = vpack.c.b16 %v338, %v337
          %v346 = vpack.c.b16 %v340, %v339
          %v347 = vpack.c.b16 %v342, %v341
          %v348 = vpack.c.b16 %v344, %v343
          %vm353 = vcmask 523264
          %v355 = vsel %vm353, %v325, 0
          %v358 = vsel %vm353, %v326, 0
          %v361 = vsel %vm353, %v327, 0
          %v364 = vsel %vm353, %v328, 0
          %366 = vmatprep.subr.bf16.mxu0 0
          %367 = vmatpush1.bf16.msra.mxu0 0
          %368 = vmatprep.subr.bf16.mxu0 0
          %369 = vmatpush1.bf16.msra.mxu0 0
          %370 = vmatprep.subr.bf16.mxu0 0
          %371 = vmatpush1.bf16.msra.mxu0 0
          %372 = vmatprep.subr.bf16.mxu0 0
          %373 = vmatpush1.bf16.msra.mxu0 0
          %374 = vmatprep.subr.bf16.mxu0 0
          %375 = vmatpush1.bf16.msra.mxu0 %v348
          %376 = vmatprep.subr.bf16.mxu0 0
          %377 = vmatpush1.bf16.msra.mxu0 %v347
          %378 = vmatprep.subr.bf16.mxu0 0
          %379 = vmatpush1.bf16.msra.mxu0 %v346
          %380 = vmatprep.subr.bf16.mxu0 0
          %381 = vmatpush1.bf16.msra.mxu0 %v345
          %382 = vmatprep.subr.bf16.mxu0 0
          %383 = vmatpush2.bf16.msra.mxu0 0
          %384 = vmatprep.subr.bf16.mxu0 0
          %385 = vmatpush2.bf16.msra.mxu0 0
          %386 = vmatprep.subr.bf16.mxu0 0
          %387 = vmatpush2.bf16.msra.mxu0 0
          %388 = vmatprep.subr.bf16.mxu0 0
          %389 = vmatpush2.bf16.msra.mxu0 0
          %390 = vmatprep.subr.bf16.mxu0 0
          %391 = vmatpush2.bf16.msra.mxu0 0
          %392 = vmatprep.subr.bf16.mxu0 0
          %393 = vmatpush2.bf16.msra.mxu0 0
          %394 = vmatprep.subr.bf16.mxu0 0
          %395 = vmatpush2.bf16.msra.mxu0 0
          %396 = vmatprep.subr.bf16.mxu0 0
          %397 = vmatpush2.bf16.msra.mxu0 0
          %398 = vmatprep.mubr.bf16.mxu0 0
          %399 = vmatmul.mubr.bf16.gmra.mxu0 %v355
          %v400 = vpop.f32.mrf.mxu0
          %v401 = vadd.f32 0.0, %v400
          %v402 = vpop.f32.mrf.mxu0
          %v403 = vpop.f32.mrf.mxu0
          %v404 = vadd.f32 0.0, %v403
          %v405 = vpop.f32.mrf.mxu0
          %406 = vmatprep.mubr.bf16.mxu0 0
          %407 = vmatmul.mubr.bf16.gmra.mxu0 %v358
          %v408 = vpop.f32.mrf.mxu0
          %v409 = vadd.f32 0.0, %v408
          %v410 = vpop.f32.mrf.mxu0
          %v411 = vpop.f32.mrf.mxu0
          %v412 = vadd.f32 0.0, %v411
          %v413 = vpop.f32.mrf.mxu0
          %414 = vmatprep.mubr.bf16.mxu0 0
          %415 = vmatmul.mubr.bf16.gmra.mxu0 %v361
          %v416 = vpop.f32.mrf.mxu0
          %v417 = vadd.f32 0.0, %v416
          %v418 = vpop.f32.mrf.mxu0
          %v419 = vpop.f32.mrf.mxu0
          %v420 = vadd.f32 0.0, %v419
          %v421 = vpop.f32.mrf.mxu0
          %422 = vmatprep.mubr.bf16.mxu0 0
          %423 = vmatmul.mubr.bf16.gmra.mxu0 %v364
          %v424 = vpop.f32.mrf.mxu0
          %v425 = vadd.f32 0.0, %v424
          %v426 = vpop.f32.mrf.mxu0
          %v427 = vpop.f32.mrf.mxu0
          %v428 = vadd.f32 0.0, %v427
          %v429 = vpop.f32.mrf.mxu0
          %430 = vdwg.mxu0
          %v431 = vmul.f32 %v401, 0.9
          %v432 = vmul.f32 %v404, 0.9
          %v433 = vmul.f32 %v409, 0.9
          %v434 = vmul.f32 %v412, 0.9
          %v435 = vmul.f32 %v417, 0.9
          %v436 = vmul.f32 %v420, 0.9
          %v437 = vmul.f32 %v425, 0.9
          %v438 = vmul.f32 %v428, 0.9
          %v439 = vunpack.c.l.bf16 %v301
          %v440 = vunpack.c.l.bf16 %v302
          %v441 = vunpack.c.l.bf16 %v303
          %v442 = vunpack.c.l.bf16 %v304
          %v443 = vunpack.c.l.bf16 %v305
          %v444 = vunpack.c.l.bf16 %v306
          %v445 = vunpack.c.l.bf16 %v307
          %v446 = vunpack.c.l.bf16 %v308
          %v447 = vmul.f32 %v439, 0.1
          %v448 = vmul.f32 %v440, 0.1
          %v449 = vmul.f32 %v441, 0.1
          %v450 = vmul.f32 %v442, 0.1
          %v451 = vmul.f32 %v443, 0.1
          %v452 = vmul.f32 %v444, 0.1
          %v453 = vmul.f32 %v445, 0.1
          %v454 = vmul.f32 %v446, 0.1
          %v455 = vadd.f32 %v431, %v447
          %v456 = vadd.f32 %v432, %v448
          %v457 = vadd.f32 %v433, %v449
          %v458 = vadd.f32 %v434, %v450
          %v459 = vadd.f32 %v435, %v451
          %v460 = vadd.f32 %v436, %v452
          %v461 = vadd.f32 %v437, %v453
          %v462 = vadd.f32 %v438, %v454
          %v463 = vpack.c.bf16 %v456, %v455
          %v464 = vpack.c.bf16 %v458, %v457
          %v465 = vpack.c.bf16 %v460, %v459
          %v466 = vpack.c.bf16 %v462, %v461
          %v471 = vunpack.c.l.b16 %v463
          %v472 = vunpack.c.h.b16 %v463
          %v473 = vunpack.c.l.b16 %v464
          %v474 = vunpack.c.h.b16 %v464
          %v475 = vunpack.c.l.b16 %v465
          %v476 = vunpack.c.h.b16 %v465
          %v477 = vunpack.c.l.b16 %v466
          %v478 = vunpack.c.h.b16 %v466
          %v479 = vpack.c.b16 %v471, %v471
          %v480 = vpack.c.b16 %v472, %v472
          %v481 = vpack.c.b16 %v473, %v473
          %v482 = vpack.c.b16 %v474, %v474
          %v483 = vpack.c.b16 %v475, %v475
          %v484 = vpack.c.b16 %v476, %v476
          %v485 = vpack.c.b16 %v477, %v477
          %v486 = vpack.c.b16 %v478, %v478
          %s495 = smul.u32 %s274, 8
          %s496 = sadd.s32 %s275, %s495
          %s497 = smul.addr %s496, 4
          %s498 = scalar_lea.vmem [#allocation2], %s497
          %499 = vst [vmem:[%s498] sm:$0xf] %v479
          %500 = vst [vmem:[%s498 + $0x4] sm:$0xf] %v480
          %501 = vst [vmem:[%s498 + $0x8] sm:$0xf] %v481
          %502 = vst [vmem:[%s498 + $0xc] sm:$0xf] %v482
          %503 = vst [vmem:[%s498 + $0x10] sm:$0xf] %v483
          %504 = vst [vmem:[%s498 + $0x14] sm:$0xf] %v484
          %505 = vst [vmem:[%s498 + $0x18] sm:$0xf] %v485
          %506 = vst [vmem:[%s498 + $0x1c] sm:$0xf] %v486
          %p507 = scmp.eq.s32.totalorder %s24, 3
          // Predicated region
          $region45: #{tpu_custom_call.1} parent=43 // pred_check
            %p508 = pneg %p507
          $region46: #{tpu_custom_call.1} parent=43 // pred_check_branch
            %510 = sbr.rel (%p508) target = $region48
          $region47: #{tpu_custom_call.1} parent=43 // pred_region
            %511 = vst [vmem:[%s198] sm:$0xff] %v455
            %512 = vst [vmem:[%s198 + $0x8] sm:$0xff] %v456
            %513 = vst [vmem:[%s198 + $0x10] sm:$0xff] %v457
            %514 = vst [vmem:[%s198 + $0x18] sm:$0xff] %v458
            %515 = vst [vmem:[%s198 + $0x20] sm:$0xff] %v459
            %516 = vst [vmem:[%s198 + $0x28] sm:$0xff] %v460
            %517 = vst [vmem:[%s198 + $0x30] sm:$0xff] %v461
            %518 = vst [vmem:[%s198 + $0x38] sm:$0xff] %v462
          $region48: #{tpu_custom_call.1} parent=43 // pred_fallthru
            _
        $region44: #{tpu_custom_call.1} parent=27 // pred_fallthru
          _
        %s519 = sand.u32 %s95, 1
        %s520 = scalar_lea.sflag [#allocation5], %s519
        %s521 = sand.u32 %s95, 1
        %s522 = smul.addr %s521, 64
        %s523 = scalar_lea.vmem [#allocation8], %s522
        // Predicated region
        $region49: #{tpu_custom_call.1} parent=27 // pred_check
          %p524 = pneg %p105
        $region50: #{tpu_custom_call.1} parent=27 // pred_check_branch
          %526 = sbr.rel (%p524) target = $region52
        $region51: #{tpu_custom_call.1} parent=27 // pred_region
          %p527 = scmp.eq.s32.totalorder %s24, 3
          %s528 = scalar_select %p527, %s25, 0
          %s529 = smul.u32 8, %s528
          %s531 = ssub.s32 1024, 1024
          %532 = vsyncadd %s520, %s531
          %s533 = smul.addr %s529, 128
          %s534 = scalar_lea.hbm %s2, %s533
          %s535 = sshll.u32 %s523, 4
          %s536 = int_to_ptr.vmem [resolvable:$true] %s535
          %541 = dma.vmem_to_hbm [thread:$0]  %s536, 1024, %s534, %s520, 128, 128, 8
        $region52: #{tpu_custom_call.1} parent=27 // pred_fallthru
          _
      $region28: #{tpu_custom_call.1} parent=5 // pred_fallthru
        _
      %p542 = scmp.le.s32.totalorder 2, %s15
      // Predicated region
      $region53: #{tpu_custom_call.1} parent=5 // pred_check
        %p543 = pneg %p542
      $region54: #{tpu_custom_call.1} parent=5 // pred_check_branch
        %545 = sbr.rel (%p543) target = $region56
      $region55: #{tpu_custom_call.1} parent=5 // pred_region
        %s546 = ssub.s32 %s15, 2
        // Predicated region
        $region57: #{tpu_custom_call.1} parent=55 // pred_check
          %p547 = pneg %p111
        $region58: #{tpu_custom_call.1} parent=55 // pred_check_branch
          %549 = sbr.rel (%p547) target = $region60
        $region59: #{tpu_custom_call.1} parent=55 // pred_region
          %s550 = sand.u32 %s96, 1
          %s551 = scalar_lea.sflag [#allocation5], %s550
          %s552 = sand.u32 %s96, 1
          %s553 = smul.addr %s552, 64
          %s554 = scalar_lea.vmem [#allocation8], %s553
          %555 = dma.done %s551, 1024
        $region60: #{tpu_custom_call.1} parent=55 // pred_fallthru
          _
      $region56: #{tpu_custom_call.1} parent=5 // pred_fallthru
        _
    $region6: #{tpu_custom_call.1} parent=1 // loop_footer
      %s19 = sadd.s32 1, %s15
    $region7: #{tpu_custom_call.1} parent=1 // loop_footer_branch
      %14 = sbr.rel target = $region3
    $region8: #{tpu_custom_call.1} parent=1 // loop_exit
      _
    %556 = vsyncpa [#allocation4], 1
    %s557 = scalar_lea.sflag [#allocation4], 1
    %558 = vsyncpa %s557, 1
    %559 = vsyncpa [#allocation7], 1
    %560 = vsyncpa [#allocation5], 1
    %s561 = scalar_lea.sflag [#allocation5], 1
    %562 = vsyncpa %s561, 1

</llo_original>
